<compile_context>
chip_gen: v7x
topology: tpu7x:2x2x1
jax: 0.10.0
libtpu: 0.0.40
codegen_flags: <defaults>
</compile_context>

<pallas_src>
import jax
import jax.numpy as jnp
from jax.experimental import pallas as pl
from jax.experimental.pallas import tpu as pltpu

_LEAKY_SLOPE = 0.01   # nn.LeakyReLU() default negative_slope
_LANE = 128
_TILE_M = 512         # max rows per grid step


def _leaky_relu(v):
    # max(v, a*v) == LeakyReLU(v) for 0 < a < 1 (one VALU op cheaper than
    # compare + select).
    return jnp.maximum(v, _LEAKY_SLOPE * v)


def _round_up(n, m):
    return ((n + m - 1) // m) * m


def _pad2d(a, rows, cols):
    return jnp.pad(a, ((0, rows - a.shape[0]), (0, cols - a.shape[1])))


def discriminator_kernel(x_ref,
                         w1_ref, b1_ref,
                         w2_ref, b2_ref,
                         w3_ref, b3_ref,
                         w4_ref, b4_ref,
                         o_ref):
    """One (TILE_M, Hp) row-tile of the fused 4-layer MLP (eval mode).

    Layers 1-3: MXU matmuls, bf16 operands, f32 accumulation; LeakyReLU of
    layers 1-2 runs on packed bf16 vregs.  The width-1 head is an NT f32
    matmul producing a lane-dense (1, TILE_M) row (no masked column stores).
    Dropout(0.2) == identity (eval mode).
    """
    x = x_ref[...]                                                  # (TM, Hp) bf16

    h = jnp.dot(x, w1_ref[...], preferred_element_type=jnp.float32)
    h = _leaky_relu((h + b1_ref[...]).astype(jnp.bfloat16))         # (TM, Hp) bf16

    h = jnp.dot(h, w2_ref[...], preferred_element_type=jnp.float32)
    h = _leaky_relu((h + b2_ref[...]).astype(jnp.bfloat16))         # (TM, H2p) bf16

    h = jnp.dot(h, w3_ref[...], preferred_element_type=jnp.float32)
    h = _leaky_relu(h + b3_ref[...])                                # (TM, H3p) f32

    # Head (fan_out = 1): out[m] = sum_k h[m, k] * w4[k] + b4, computed as a
    # transposed-RHS matmul so the result is already lane-major (1, TM).
    out_row = jax.lax.dot_general(
        w4_ref[...], h,
        dimension_numbers=(((1,), (1,)), ((), ())),
        preferred_element_type=jnp.float32)                         # (1, TM) f32
    o_ref[0] = (out_row + b4_ref[0, 0]).astype(o_ref.dtype)


def init_discriminator_params(key, hidden_size):
    """Params matching nn.Linear shapes & default init ranges, stored (in, out)."""
    h = hidden_size
    dims = [(h, h), (h, h // 2), (h // 2, h // 4), (h // 4, 1)]
    params = []
    for fan_in, fan_out in dims:
        key, kw, kb = jax.random.split(key, 3)
        bound = float(fan_in) ** -0.5
        w = jax.random.uniform(kw, (fan_in, fan_out), jnp.float32, -bound, bound)
        b = jax.random.uniform(kb, (1, fan_out), jnp.float32, -bound, bound)
        params.append((w, b))
    return params


def prepare_discriminator_params(params):
    """One-time lane padding (multiples of 128) + dtype cast of the weights.

    Run once (at init / checkpoint load), NOT per forward call, so the forward
    issues no per-call weight-prep HBM traffic or XLA ops.
    """
    (w1, b1), (w2, b2), (w3, b3), (w4, b4) = params
    H = w1.shape[0]
    H2 = w2.shape[1]
    H3 = w3.shape[1]
    Hp, H2p, H3p = (_round_up(d, _LANE) for d in (H, H2, H3))
    return (
        _pad2d(w1, Hp, Hp).astype(jnp.bfloat16),
        _pad2d(b1, 1, Hp).astype(jnp.float32),
        _pad2d(w2, Hp, H2p).astype(jnp.bfloat16),
        _pad2d(b2, 1, H2p).astype(jnp.float32),
        _pad2d(w3, H2p, H3p).astype(jnp.bfloat16),
        _pad2d(b3, 1, H3p).astype(jnp.float32),
        _pad2d(w4.T, 1, H3p).astype(jnp.float32),   # (1, H3p) row, f32 head
        b4.reshape(1, 1).astype(jnp.float32),       # SMEM scalar
    )


@jax.jit
def _forward_jit(encoder_output, prep):
    w1, b1, w2, b2, w3, b3, w4, b4 = prep
    B, S, H = encoder_output.shape
    Hp, H2p, H3p = w1.shape[0], w2.shape[1], w3.shape[1]

    M = B * S
    x = encoder_output.reshape(M, H).astype(jnp.bfloat16)
    if H != Hp:
        # Only when hidden_size isn't a lane multiple (tiny demo sizes); for
        # H % 128 == 0 there is no wrapper-side copy of x at all.
        x = jnp.pad(x, ((0, 0), (0, Hp - H)))

    # v7x: keep >= 2 grid steps so the "parallel" M axis shards across both
    # TensorCores; for large M use 512-row tiles (amortize per-step overhead).
    tile_m = min(_TILE_M, max(8, _round_up((M + 1) // 2, 8)))
    if x.shape[0] < tile_m:
        x = jnp.pad(x, ((0, tile_m - x.shape[0]), (0, 0)))
    num_tiles = pl.cdiv(x.shape[0], tile_m)   # ragged last block handled by Pallas

    rows = num_tiles * tile_m
    flops = 2 * rows * (Hp * Hp + Hp * H2p + H2p * H3p + H3p)
    bytes_accessed = sum(int(a.size) * a.dtype.itemsize
                         for a in (x, w1, b1, w2, b2, w3, b3, w4, b4)) + rows * 4
    cost = pl.CostEstimate(flops=flops, transcendentals=0,
                           bytes_accessed=bytes_accessed)

    const = lambda i: (0, 0)
    out = pl.pallas_call(
        discriminator_kernel,
        out_shape=jax.ShapeDtypeStruct((num_tiles, 1, tile_m), jnp.float32),
        grid=(num_tiles,),
        in_specs=[
            pl.BlockSpec((tile_m, Hp), lambda i: (i, 0)),       # x: streamed
            pl.BlockSpec((Hp, Hp), const),                      # w1: resident
            pl.BlockSpec((1, Hp), const),                       # b1
            pl.BlockSpec((Hp, H2p), const),                     # w2
            pl.BlockSpec((1, H2p), const),                      # b2
            pl.BlockSpec((H2p, H3p), const),                    # w3
            pl.BlockSpec((1, H3p), const),                      # b3
            pl.BlockSpec((1, H3p), const),                      # w4 row
            pl.BlockSpec(memory_space=pltpu.MemorySpace.SMEM),  # b4 scalar
        ],
        out_specs=pl.BlockSpec((1, 1, tile_m), lambda i: (i, 0, 0)),
        compiler_params=pltpu.CompilerParams(
            dimension_semantics=("parallel",),
            vmem_limit_bytes=32 * 1024 * 1024,
        ),
        cost_estimate=cost,
    )(x, w1, b1, w2, b2, w3, b3, w4, b4)

    # Lane-dense (num_tiles, 1, tile_m) slab -> (M, 1) column, drop row padding.
    return out.reshape(num_tiles * tile_m, 1)[:M]


def discriminator_forward(encoder_output, prepared_params, training=False):
    if training:
        # TODO(synk): training-mode stochastic dropout not implemented.
        raise NotImplementedError("Discriminator kernel implements eval-mode "
                                  "(dropout == identity) only.")
    return _forward_jit(encoder_output, prepared_params)


def _reference_forward(encoder_output, params):
    """Plain-JAX reference mirroring the kernel's dtype path."""
    (w1, b1), (w2, b2), (w3, b3), (w4, b4) = params
    B, S, H = encoder_output.shape
    x = encoder_output.reshape(B * S, H).astype(jnp.bfloat16)
    h = jnp.dot(x, w1.astype(jnp.bfloat16),
                preferred_element_type=jnp.float32) + b1
    h = _leaky_relu(h.astype(jnp.bfloat16))
    h = jnp.dot(h, w2.astype(jnp.bfloat16),
                preferred_element_type=jnp.float32) + b2
    h = _leaky_relu(h.astype(jnp.bfloat16))
    h = jnp.dot(h, w3.astype(jnp.bfloat16),
                preferred_element_type=jnp.float32) + b3
    h = _leaky_relu(h)                                   # f32, like the kernel
    return jnp.dot(h, w4, preferred_element_type=jnp.float32) + b4


if __name__ == "__main__":
    batch, seq, hidden = 2, 8, 32

    key = jax.random.PRNGKey(0)
    key, kx = jax.random.split(key)
    encoder_output = jax.random.normal(kx, (batch, seq, hidden), jnp.float32)

    params = init_discriminator_params(key, hidden)
    prepared = prepare_discriminator_params(params)      # pad/cast once

    out = discriminator_forward(encoder_output, prepared)
    out = jax.block_until_ready(out)

    ref = _reference_forward(encoder_output, params)
    assert out.shape == (batch * seq, 1), out.shape
    max_err = float(jnp.max(jnp.abs(out - ref)))
    assert jnp.allclose(out, ref, atol=3e-3, rtol=3e-3), max_err

    print("KERNEL_OK")
</pallas_src>

<mosaic_0001>
module attributes {stable_mosaic.version = 11 : i64} {
  func.func @discriminator_kernel(%arg0: i32, %arg1: memref<8x128xbf16, #tpu.memory_space<vmem>>, %arg2: memref<128x128xbf16, #tpu.memory_space<vmem>>, %arg3: memref<1x128xf32, #tpu.memory_space<vmem>>, %arg4: memref<128x128xbf16, #tpu.memory_space<vmem>>, %arg5: memref<1x128xf32, #tpu.memory_space<vmem>>, %arg6: memref<128x128xbf16, #tpu.memory_space<vmem>>, %arg7: memref<1x128xf32, #tpu.memory_space<vmem>>, %arg8: memref<1x128xf32, #tpu.memory_space<vmem>>, %arg9: memref<1x1xf32, #tpu.memory_space<smem>>, %arg10: memref<1x1x8xf32, #tpu.memory_space<vmem>>) attributes {dimension_semantics = [#tpu.dimension_semantics<parallel>], iteration_bounds = array<i64: 2>, scalar_prefetch = 0 : i64, scratch_operands = 0 : i64, tpu.core_type = #tpu.core_type<tc>, window_params = [{transform_indices = @transform_0, window_bounds = array<i64: 8, 128>}, {pipeline_mode = #tpu.pipeline_mode<synchronous>, transform_indices = @transform_1, window_bounds = array<i64: 128, 128>}, {pipeline_mode = #tpu.pipeline_mode<synchronous>, transform_indices = @transform_2, window_bounds = array<i64: 1, 128>}, {pipeline_mode = #tpu.pipeline_mode<synchronous>, transform_indices = @transform_3, window_bounds = array<i64: 128, 128>}, {pipeline_mode = #tpu.pipeline_mode<synchronous>, transform_indices = @transform_4, window_bounds = array<i64: 1, 128>}, {pipeline_mode = #tpu.pipeline_mode<synchronous>, transform_indices = @transform_5, window_bounds = array<i64: 128, 128>}, {pipeline_mode = #tpu.pipeline_mode<synchronous>, transform_indices = @transform_6, window_bounds = array<i64: 1, 128>}, {pipeline_mode = #tpu.pipeline_mode<synchronous>, transform_indices = @transform_7, window_bounds = array<i64: 1, 128>}, {transform_indices = @transform_8, window_bounds = array<i64: 1, 1>}, {transform_indices = @transform_9, window_bounds = array<i64: 1, 1, 8>}]} {
    %c0 = arith.constant 0 : index
    %c0_0 = arith.constant 0 : index
    %0 = vector.load %arg1[%c0, %c0_0] : memref<8x128xbf16, #tpu.memory_space<vmem>>, vector<8x128xbf16>
    %c0_1 = arith.constant 0 : index
    %c0_2 = arith.constant 0 : index
    %1 = vector.load %arg2[%c0_1, %c0_2] : memref<128x128xbf16, #tpu.memory_space<vmem>>, vector<128x128xbf16>
    %cst = arith.constant dense<0.000000e+00> : vector<8x128xf32>
    %2 = tpu.matmul %0, %1, %cst {dimension_numbers = #tpu.dot_dimension_numbers<[1], [0], [0], [1], [0, 0, 1, 1], [], []>} : vector<8x128xbf16>, vector<128x128xbf16>, vector<8x128xf32> -> vector<8x128xf32>
    %c0_3 = arith.constant 0 : index
    %c0_4 = arith.constant 0 : index
    %3 = vector.load %arg3[%c0_3, %c0_4] : memref<1x128xf32, #tpu.memory_space<vmem>>, vector<1x128xf32>
    %4 = vector.broadcast %3 : vector<1x128xf32> to vector<8x128xf32>
    %5 = arith.addf %2, %4 : vector<8x128xf32>
    %6 = arith.truncf %5 : vector<8x128xf32> to vector<8x128xbf16>
    %cst_5 = arith.constant 1.000980e-02 : bf16
    %7 = vector.broadcast %cst_5 : bf16 to vector<8x128xbf16>
    %8 = arith.mulf %7, %6 : vector<8x128xbf16>
    %9 = arith.maximumf %6, %8 : vector<8x128xbf16>
    %c0_6 = arith.constant 0 : index
    %c0_7 = arith.constant 0 : index
    %10 = vector.load %arg4[%c0_6, %c0_7] : memref<128x128xbf16, #tpu.memory_space<vmem>>, vector<128x128xbf16>
    %cst_8 = arith.constant dense<0.000000e+00> : vector<8x128xf32>
    %11 = tpu.matmul %9, %10, %cst_8 {dimension_numbers = #tpu.dot_dimension_numbers<[1], [0], [0], [1], [0, 0, 1, 1], [], []>} : vector<8x128xbf16>, vector<128x128xbf16>, vector<8x128xf32> -> vector<8x128xf32>
    %c0_9 = arith.constant 0 : index
    %c0_10 = arith.constant 0 : index
    %12 = vector.load %arg5[%c0_9, %c0_10] : memref<1x128xf32, #tpu.memory_space<vmem>>, vector<1x128xf32>
    %13 = vector.broadcast %12 : vector<1x128xf32> to vector<8x128xf32>
    %14 = arith.addf %11, %13 : vector<8x128xf32>
    %15 = arith.truncf %14 : vector<8x128xf32> to vector<8x128xbf16>
    %cst_11 = arith.constant 1.000980e-02 : bf16
    %16 = vector.broadcast %cst_11 : bf16 to vector<8x128xbf16>
    %17 = arith.mulf %16, %15 : vector<8x128xbf16>
    %18 = arith.maximumf %15, %17 : vector<8x128xbf16>
    %c0_12 = arith.constant 0 : index
    %c0_13 = arith.constant 0 : index
    %19 = vector.load %arg6[%c0_12, %c0_13] : memref<128x128xbf16, #tpu.memory_space<vmem>>, vector<128x128xbf16>
    %cst_14 = arith.constant dense<0.000000e+00> : vector<8x128xf32>
    %20 = tpu.matmul %18, %19, %cst_14 {dimension_numbers = #tpu.dot_dimension_numbers<[1], [0], [0], [1], [0, 0, 1, 1], [], []>} : vector<8x128xbf16>, vector<128x128xbf16>, vector<8x128xf32> -> vector<8x128xf32>
    %c0_15 = arith.constant 0 : index
    %c0_16 = arith.constant 0 : index
    %21 = vector.load %arg7[%c0_15, %c0_16] : memref<1x128xf32, #tpu.memory_space<vmem>>, vector<1x128xf32>
    %22 = vector.broadcast %21 : vector<1x128xf32> to vector<8x128xf32>
    %23 = arith.addf %20, %22 : vector<8x128xf32>
    %cst_17 = arith.constant 0.00999999977 : f32
    %24 = vector.broadcast %cst_17 : f32 to vector<8x128xf32>
    %25 = arith.mulf %24, %23 : vector<8x128xf32>
    %26 = arith.maximumf %23, %25 : vector<8x128xf32>
    %c0_18 = arith.constant 0 : index
    %c0_19 = arith.constant 0 : index
    %27 = vector.load %arg8[%c0_18, %c0_19] : memref<1x128xf32, #tpu.memory_space<vmem>>, vector<1x128xf32>
    %cst_20 = arith.constant dense<0.000000e+00> : vector<1x8xf32>
    %28 = tpu.matmul %27, %26, %cst_20 {dimension_numbers = #tpu.dot_dimension_numbers<[1], [1], [0], [0], [0, 0, 1, 0], [], []>} : vector<1x128xf32>, vector<8x128xf32>, vector<1x8xf32> -> vector<1x8xf32>
    %c0_21 = arith.constant 0 : index
    %c0_22 = arith.constant 0 : index
    %29 = memref.load %arg9[%c0_21, %c0_22] : memref<1x1xf32, #tpu.memory_space<smem>>
    %30 = vector.broadcast %29 : f32 to vector<1x8xf32>
    %31 = arith.addf %28, %30 : vector<1x8xf32>
    %c0_23 = arith.constant 0 : index
    %c0_24 = arith.constant 0 : index
    %c0_25 = arith.constant 0 : index
    %32 = vector.load %arg10[%c0_23, %c0_24, %c0_25] : memref<1x1x8xf32, #tpu.memory_space<vmem>>, vector<1x1x8xf32>
    %33 = vector.shape_cast %32 : vector<1x1x8xf32> to vector<1x8xf32>
    %34 = vector.shape_cast %31 : vector<1x8xf32> to vector<1x1x8xf32>
    tpu.vector_store %arg10[%c0_23, %c0_24, %c0_25], %34 {strides = array<i32>} : memref<1x1x8xf32, #tpu.memory_space<vmem>>, vector<1x1x8xf32>,
    return
  }
  func.func @transform_0(%arg0: i32) -> (i32, i32) {
    %c0_i32 = arith.constant 0 : i32
    %c0_i32_0 = arith.constant 0 : i32
    return %arg0, %c0_i32 : i32, i32
  }
  func.func @transform_1(%arg0: i32) -> (i32, i32) {
    %c0_i32 = arith.constant 0 : i32
    %c0_i32_0 = arith.constant 0 : i32
    %c0_i32_1 = arith.constant 0 : i32
    return %c0_i32, %c0_i32_0 : i32, i32
  }
  func.func @transform_2(%arg0: i32) -> (i32, i32) {
    %c0_i32 = arith.constant 0 : i32
    %c0_i32_0 = arith.constant 0 : i32
    %c0_i32_1 = arith.constant 0 : i32
    return %c0_i32, %c0_i32_0 : i32, i32
  }
  func.func @transform_3(%arg0: i32) -> (i32, i32) {
    %c0_i32 = arith.constant 0 : i32
    %c0_i32_0 = arith.constant 0 : i32
    %c0_i32_1 = arith.constant 0 : i32
    return %c0_i32, %c0_i32_0 : i32, i32
  }
  func.func @transform_4(%arg0: i32) -> (i32, i32) {
    %c0_i32 = arith.constant 0 : i32
    %c0_i32_0 = arith.constant 0 : i32
    %c0_i32_1 = arith.constant 0 : i32
    return %c0_i32, %c0_i32_0 : i32, i32
  }
  func.func @transform_5(%arg0: i32) -> (i32, i32) {
    %c0_i32 = arith.constant 0 : i32
    %c0_i32_0 = arith.constant 0 : i32
    %c0_i32_1 = arith.constant 0 : i32
    return %c0_i32, %c0_i32_0 : i32, i32
  }
  func.func @transform_6(%arg0: i32) -> (i32, i32) {
    %c0_i32 = arith.constant 0 : i32
    %c0_i32_0 = arith.constant 0 : i32
    %c0_i32_1 = arith.constant 0 : i32
    return %c0_i32, %c0_i32_0 : i32, i32
  }
  func.func @transform_7(%arg0: i32) -> (i32, i32) {
    %c0_i32 = arith.constant 0 : i32
    %c0_i32_0 = arith.constant 0 : i32
    %c0_i32_1 = arith.constant 0 : i32
    return %c0_i32, %c0_i32_0 : i32, i32
  }
  func.func @transform_8(%arg0: i32) -> (i32, i32) {
    %c0_i32 = arith.constant 0 : i32
    %c0_i32_0 = arith.constant 0 : i32
    %c0_i32_1 = arith.constant 0 : i32
    return %c0_i32, %c0_i32_0 : i32, i32
  }
  func.func @transform_9(%arg0: i32) -> (i32, i32, i32) {
    %c0_i32 = arith.constant 0 : i32
    %c0_i32_0 = arith.constant 0 : i32
    %c0_i32_1 = arith.constant 0 : i32
    return %arg0, %c0_i32, %c0_i32_0 : i32, i32, i32
  }
}

</mosaic_0001>

<llo_original>
// kernel: _forward_jit.1
$region0: #{_forward_jit.1}
  #allocation0 [shape = 'u32[]', space=smem, size = 0x4, offset = 0x4, fixed_abs, tag = 'smem constant byte address 0x4 - core index']
  #allocation1 [shape = 'u32[144,128]{1,0:T(1,128)}', space=vmem, size = 0x12000, scoped, tag = 'internal scratch']
  #allocation2 [shape = 'f32[1,1]{1,0:T(1,128)S(6)}', space=smem, size = 0x200, scoped, tag = 'scoped memory for _forward_jit.1']
  %s0 = inlined_call_operand.vmem [shape: bf16[16,128], index: 0, kind: input, shape index: {}]
  %s1 = inlined_call_operand.vmem [shape: bf16[128,128], index: 1, kind: input, shape index: {}]
  %s2 = inlined_call_operand.vmem [shape: f32[1,128], index: 2, kind: input, shape index: {}]
  %s3 = inlined_call_operand.hbm [shape: bf16[128,128], index: 3, kind: input, shape index: {}]
  %s4 = inlined_call_operand.vmem [shape: f32[1,128], index: 4, kind: input, shape index: {}]
  %s5 = inlined_call_operand.hbm [shape: bf16[128,128], index: 5, kind: input, shape index: {}]
  %s6 = inlined_call_operand.vmem [shape: f32[1,128], index: 6, kind: input, shape index: {}]
  %s7 = inlined_call_operand.hbm [shape: f32[1,128], index: 7, kind: input, shape index: {}]
  %s8 = inlined_call_operand.<no memory space> [shape: f32[1,1], index: 8, kind: input, shape index: {}]
  %s9 = inlined_call_operand.vmem [shape: f32[2,1,8], index: 9, kind: output, shape index: {}]
  %s10 = sld [smem:[#allocation0]]
  $region81: #{_forward_jit.1} parent=0
    _
  %s12 = ssub.s32 1, %s10
  %s13 = scalar_select 0, %s12, %s10
  %14 = sst [smem:[#allocation2]] %s8
  $region1: #{_forward_jit.1} parent=0
    #allocation3 [shape = 'u8[32768]{0}', space=vmem, size = 0x8000, scoped, tag = 'input window, operand 3, single buffered']
    #allocation4 [shape = 's32[2]{0}', space=sflag, size = 0x8, scoped, tag = 'scoped memory for _forward_jit.1']
    #allocation5 [shape = 'u8[32768]{0}', space=vmem, size = 0x8000, scoped, tag = 'input window, operand 5, single buffered']
    #allocation6 [shape = 's32[1]{0}', space=sflag, size = 0x4, scoped, tag = 'scoped memory for _forward_jit.1']
    #allocation7 [shape = 'u8[512]{0}', space=vmem, size = 0x400, scoped, tag = 'input window, operand 7, single buffered']
    %15 = vsyncpa [#allocation4], 0
    %16 = vsyncpa [#allocation6], 0
    loop: start=0, step=1, limit=4
    $region2: #{_forward_jit.1} parent=1 // loop_pre_header
      _
    $region3: #{_forward_jit.1} parent=1 // loop_header
      %s18 = sphi 0, %s22
      %p19 = scmp.ge.s32.totalorder %s18, 4
      %s28 = sphi 0, %s30
      %s31 = sphi 0, %s28
      %s32 = sphi 0, %s31
      %s48 = sphi 0, %s32
      %s52 = sphi 0, %s52
      %s54 = sphi 0, %s52
      %s55 = sphi 0, %s54
      %s69 = sphi 0, %s55
      %s73 = sphi 0, %s73
      %s75 = sphi 0, %s73
      %s76 = sphi 0, %s75
      %s90 = sphi 0, %s76
      %s94 = sphi 0, %s94
      %s96 = sphi 0, %s94
      %s97 = sphi 0, %s96
      %s111 = sphi 0, %s97
      %s115 = sphi 0, %s115
      %s117 = sphi 0, %s115
      %s118 = sphi 0, %s117
      %s132 = sphi 0, %s118
      %s136 = sphi 0, %s136
      %s138 = sphi 0, %s136
      %s139 = sphi 0, %s138
      %s153 = sphi 0, %s139
      %s157 = sphi 0, %s157
      %s159 = sphi 0, %s157
      %s160 = sphi 0, %s159
      %s174 = sphi 0, %s160
      %s178 = sphi 0, %s178
      %s180 = sphi 0, %s178
      %s181 = sphi 0, %s180
      %s195 = sphi 0, %s181
      %s199 = sphi 0, %s199
      %s201 = sphi 0, %s199
      %s202 = sphi 0, %s201
      %s216 = sphi 0, %s202
      %s222 = sphi 0, %s224
      %s225 = sphi 0, %s222
      %s226 = sphi 0, %s225
      %s242 = sphi 0, %s226
    $region4: #{_forward_jit.1} parent=1 // loop_header_branch
      %21 = sbr.rel (%p19) target = $region8
    $region5: #{_forward_jit.1} parent=1 // loop_body
      %s23 = ssub.s32 %s18, 1
      %s24 = ssub.s32 %s18, 2
      %s25 = sadd.s32 %s18, 1
      %s26 = ssub.s32 %s18, %s25
      %p27 = scmp.eq.s32.totalorder %s26, 0
      %s29 = sadd.s32 %s28, 1
      %s30 = scalar_select %p27, %s28, %s29
      %p33 = pneg %p27
      %p34 = scmp.eq.s32.totalorder %s18, 1
      %p35 = por %p33, %p34
      %p36 = scmp.ne.s32.totalorder %s28, %s31
      %p37 = scmp.eq.s32.totalorder %s18, 0
      %p38 = por %p36, %p37
      %p39 = scmp.ne.s32.totalorder %s28, %s31
      %p40 = scmp.eq.s32.totalorder %s23, 1
      %p41 = por %p39, %p40
      %p42 = scmp.ne.s32.totalorder %s31, %s32
      %p43 = scmp.eq.s32.totalorder %s23, 0
      %p44 = por %p42, %p43
      %p45 = scmp.ne.s32.totalorder %s31, %s32
      %p46 = scmp.eq.s32.totalorder %s24, 1
      %p47 = por %p45, %p46
      %p49 = scmp.ne.s32.totalorder %s32, %s48
      %p50 = scmp.eq.s32.totalorder %s24, 0
      %p51 = por %p49, %p50
      %s53 = sadd.s32 %s52, 1
      %p56 = scmp.eq.s32.totalorder %s18, 1
      %p57 = scmp.ne.s32.totalorder %s52, %s54
      %p58 = scmp.eq.s32.totalorder %s18, 0
      %p59 = por %p57, %p58
      %p60 = scmp.ne.s32.totalorder %s52, %s54
      %p61 = scmp.eq.s32.totalorder %s23, 1
      %p62 = por %p60, %p61
      %p63 = scmp.ne.s32.totalorder %s54, %s55
      %p64 = scmp.eq.s32.totalorder %s23, 0
      %p65 = por %p63, %p64
      %p66 = scmp.ne.s32.totalorder %s54, %s55
      %p67 = scmp.eq.s32.totalorder %s24, 1
      %p68 = por %p66, %p67
      %p70 = scmp.ne.s32.totalorder %s55, %s69
      %p71 = scmp.eq.s32.totalorder %s24, 0
      %p72 = por %p70, %p71
      %s74 = sadd.s32 %s73, 1
      %p77 = scmp.eq.s32.totalorder %s18, 1
      %p78 = scmp.ne.s32.totalorder %s73, %s75
      %p79 = scmp.eq.s32.totalorder %s18, 0
      %p80 = por %p78, %p79
      %p81 = scmp.ne.s32.totalorder %s73, %s75
      %p82 = scmp.eq.s32.totalorder %s23, 1
      %p83 = por %p81, %p82
      %p84 = scmp.ne.s32.totalorder %s75, %s76
      %p85 = scmp.eq.s32.totalorder %s23, 0
      %p86 = por %p84, %p85
      %p87 = scmp.ne.s32.totalorder %s75, %s76
      %p88 = scmp.eq.s32.totalorder %s24, 1
      %p89 = por %p87, %p88
      %p91 = scmp.ne.s32.totalorder %s76, %s90
      %p92 = scmp.eq.s32.totalorder %s24, 0
      %p93 = por %p91, %p92
      %s95 = sadd.s32 %s94, 1
      %p98 = scmp.eq.s32.totalorder %s18, 1
      %p99 = scmp.ne.s32.totalorder %s94, %s96
      %p100 = scmp.eq.s32.totalorder %s18, 0
      %p101 = por %p99, %p100
      %p102 = scmp.ne.s32.totalorder %s94, %s96
      %p103 = scmp.eq.s32.totalorder %s23, 1
      %p104 = por %p102, %p103
      %p105 = scmp.ne.s32.totalorder %s96, %s97
      %p106 = scmp.eq.s32.totalorder %s23, 0
      %p107 = por %p105, %p106
      %p108 = scmp.ne.s32.totalorder %s96, %s97
      %p109 = scmp.eq.s32.totalorder %s24, 1
      %p110 = por %p108, %p109
      %p112 = scmp.ne.s32.totalorder %s97, %s111
      %p113 = scmp.eq.s32.totalorder %s24, 0
      %p114 = por %p112, %p113
      %s116 = sadd.s32 %s115, 1
      %p119 = scmp.eq.s32.totalorder %s18, 1
      %p120 = scmp.ne.s32.totalorder %s115, %s117
      %p121 = scmp.eq.s32.totalorder %s18, 0
      %p122 = por %p120, %p121
      %p123 = scmp.ne.s32.totalorder %s115, %s117
      %p124 = scmp.eq.s32.totalorder %s23, 1
      %p125 = por %p123, %p124
      %p126 = scmp.ne.s32.totalorder %s117, %s118
      %p127 = scmp.eq.s32.totalorder %s23, 0
      %p128 = por %p126, %p127
      %p129 = scmp.ne.s32.totalorder %s117, %s118
      %p130 = scmp.eq.s32.totalorder %s24, 1
      %p131 = por %p129, %p130
      %p133 = scmp.ne.s32.totalorder %s118, %s132
      %p134 = scmp.eq.s32.totalorder %s24, 0
      %p135 = por %p133, %p134
      %s137 = sadd.s32 %s136, 1
      %p140 = scmp.eq.s32.totalorder %s18, 1
      %p141 = scmp.ne.s32.totalorder %s136, %s138
      %p142 = scmp.eq.s32.totalorder %s18, 0
      %p143 = por %p141, %p142
      %p144 = scmp.ne.s32.totalorder %s136, %s138
      %p145 = scmp.eq.s32.totalorder %s23, 1
      %p146 = por %p144, %p145
      %p147 = scmp.ne.s32.totalorder %s138, %s139
      %p148 = scmp.eq.s32.totalorder %s23, 0
      %p149 = por %p147, %p148
      %p150 = scmp.ne.s32.totalorder %s138, %s139
      %p151 = scmp.eq.s32.totalorder %s24, 1
      %p152 = por %p150, %p151
      %p154 = scmp.ne.s32.totalorder %s139, %s153
      %p155 = scmp.eq.s32.totalorder %s24, 0
      %p156 = por %p154, %p155
      %s158 = sadd.s32 %s157, 1
      %p161 = scmp.eq.s32.totalorder %s18, 1
      %p162 = scmp.ne.s32.totalorder %s157, %s159
      %p163 = scmp.eq.s32.totalorder %s18, 0
      %p164 = por %p162, %p163
      %p165 = scmp.ne.s32.totalorder %s157, %s159
      %p166 = scmp.eq.s32.totalorder %s23, 1
      %p167 = por %p165, %p166
      %p168 = scmp.ne.s32.totalorder %s159, %s160
      %p169 = scmp.eq.s32.totalorder %s23, 0
      %p170 = por %p168, %p169
      %p171 = scmp.ne.s32.totalorder %s159, %s160
      %p172 = scmp.eq.s32.totalorder %s24, 1
      %p173 = por %p171, %p172
      %p175 = scmp.ne.s32.totalorder %s160, %s174
      %p176 = scmp.eq.s32.totalorder %s24, 0
      %p177 = por %p175, %p176
      %s179 = sadd.s32 %s178, 1
      %p182 = scmp.eq.s32.totalorder %s18, 1
      %p183 = scmp.ne.s32.totalorder %s178, %s180
      %p184 = scmp.eq.s32.totalorder %s18, 0
      %p185 = por %p183, %p184
      %p186 = scmp.ne.s32.totalorder %s178, %s180
      %p187 = scmp.eq.s32.totalorder %s23, 1
      %p188 = por %p186, %p187
      %p189 = scmp.ne.s32.totalorder %s180, %s181
      %p190 = scmp.eq.s32.totalorder %s23, 0
      %p191 = por %p189, %p190
      %p192 = scmp.ne.s32.totalorder %s180, %s181
      %p193 = scmp.eq.s32.totalorder %s24, 1
      %p194 = por %p192, %p193
      %p196 = scmp.ne.s32.totalorder %s181, %s195
      %p197 = scmp.eq.s32.totalorder %s24, 0
      %p198 = por %p196, %p197
      %s200 = sadd.s32 %s199, 1
      %p203 = scmp.eq.s32.totalorder %s18, 1
      %p204 = scmp.ne.s32.totalorder %s199, %s201
      %p205 = scmp.eq.s32.totalorder %s18, 0
      %p206 = por %p204, %p205
      %p207 = scmp.ne.s32.totalorder %s199, %s201
      %p208 = scmp.eq.s32.totalorder %s23, 1
      %p209 = por %p207, %p208
      %p210 = scmp.ne.s32.totalorder %s201, %s202
      %p211 = scmp.eq.s32.totalorder %s23, 0
      %p212 = por %p210, %p211
      %p213 = scmp.ne.s32.totalorder %s201, %s202
      %p214 = scmp.eq.s32.totalorder %s24, 1
      %p215 = por %p213, %p214
      %p217 = scmp.ne.s32.totalorder %s202, %s216
      %p218 = scmp.eq.s32.totalorder %s24, 0
      %p219 = por %p217, %p218
      %s220 = ssub.s32 %s18, %s25
      %p221 = scmp.eq.s32.totalorder %s220, 0
      %s223 = sadd.s32 %s222, 1
      %s224 = scalar_select %p221, %s222, %s223
      %p227 = pneg %p221
      %p228 = scmp.eq.s32.totalorder %s18, 1
      %p229 = por %p227, %p228
      %p230 = scmp.ne.s32.totalorder %s222, %s225
      %p231 = scmp.eq.s32.totalorder %s18, 0
      %p232 = por %p230, %p231
      %p233 = scmp.ne.s32.totalorder %s222, %s225
      %p234 = scmp.eq.s32.totalorder %s23, 1
      %p235 = por %p233, %p234
      %p236 = scmp.ne.s32.totalorder %s225, %s226
      %p237 = scmp.eq.s32.totalorder %s23, 0
      %p238 = por %p236, %p237
      %p239 = scmp.ne.s32.totalorder %s225, %s226
      %p240 = scmp.eq.s32.totalorder %s24, 1
      %p241 = por %p239, %p240
      %p243 = scmp.ne.s32.totalorder %s226, %s242
      %p244 = scmp.eq.s32.totalorder %s24, 0
      %p245 = por %p243, %p244
      %p246 = scmp.le.s32.totalorder 1, %s18
      %p247 = scmp.lt.s32.totalorder %s18, 3
      %p248 = pnand %p246, %p247
      %p249 = pneg %p248
      // Predicated region
      $region9: #{_forward_jit.1} parent=5 // pred_check
        _
      $region10: #{_forward_jit.1} parent=5 // pred_check_branch
        %251 = sbr.rel (%p248) target = $region12
      $region11: #{_forward_jit.1} parent=5 // pred_region
        %s252 = ssub.s32 %s18, 1
        // Predicated region
        $region13: #{_forward_jit.1} parent=11 // pred_check
          %p253 = pneg %p65
        $region14: #{_forward_jit.1} parent=11 // pred_check_branch
          %255 = sbr.rel (%p253) target = $region16
        $region15: #{_forward_jit.1} parent=11 // pred_region
          _
        $region16: #{_forward_jit.1} parent=11 // pred_fallthru
          _
        // Predicated region
        $region17: #{_forward_jit.1} parent=11 // pred_check
          %p256 = pneg %p86
        $region18: #{_forward_jit.1} parent=11 // pred_check_branch
          %258 = sbr.rel (%p256) target = $region20
        $region19: #{_forward_jit.1} parent=11 // pred_region
          _
        $region20: #{_forward_jit.1} parent=11 // pred_fallthru
          _
        // Predicated region
        $region21: #{_forward_jit.1} parent=11 // pred_check
          %p259 = pneg %p107
        $region22: #{_forward_jit.1} parent=11 // pred_check_branch
          %261 = sbr.rel (%p259) target = $region24
        $region23: #{_forward_jit.1} parent=11 // pred_region
          %s263 = ssub.s32 1024, 1024
          %264 = vsyncadd [#allocation4], %s263
          %s265 = sshll.u32 [#allocation3], 4
          %s266 = int_to_ptr.vmem [resolvable:$true] %s265
          %271 = dma.hbm_to_vmem [thread:$0]  %s3, 1024, %s266, [#allocation4], 64, 64, 4
        $region24: #{_forward_jit.1} parent=11 // pred_fallthru
          _
        // Predicated region
        $region25: #{_forward_jit.1} parent=11 // pred_check
          %p272 = pneg %p128
        $region26: #{_forward_jit.1} parent=11 // pred_check_branch
          %274 = sbr.rel (%p272) target = $region28
        $region27: #{_forward_jit.1} parent=11 // pred_region
          _
        $region28: #{_forward_jit.1} parent=11 // pred_fallthru
          _
        // Predicated region
        $region29: #{_forward_jit.1} parent=11 // pred_check
          %p275 = pneg %p149
        $region30: #{_forward_jit.1} parent=11 // pred_check_branch
          %277 = sbr.rel (%p275) target = $region32
        $region31: #{_forward_jit.1} parent=11 // pred_region
          %s279 = ssub.s32 1024, 1024
          %280 = vsyncadd [#allocation6], %s279
          %s281 = sshll.u32 [#allocation5], 4
          %s282 = int_to_ptr.vmem [resolvable:$true] %s281
          %287 = dma.hbm_to_vmem [thread:$0]  %s5, 1024, %s282, [#allocation6], 64, 64, 4
        $region32: #{_forward_jit.1} parent=11 // pred_fallthru
          _
        // Predicated region
        $region33: #{_forward_jit.1} parent=11 // pred_check
          %p288 = pneg %p170
        $region34: #{_forward_jit.1} parent=11 // pred_check_branch
          %290 = sbr.rel (%p288) target = $region36
        $region35: #{_forward_jit.1} parent=11 // pred_region
          _
        $region36: #{_forward_jit.1} parent=11 // pred_fallthru
          _
        // Predicated region
        $region37: #{_forward_jit.1} parent=11 // pred_check
          %p291 = pneg %p191
        $region38: #{_forward_jit.1} parent=11 // pred_check_branch
          %293 = sbr.rel (%p291) target = $region40
        $region39: #{_forward_jit.1} parent=11 // pred_region
          %s295 = ssub.s32 16, 16
          %296 = vsyncadd [#allocation6], %s295
          %s298 = sshll.u32 [#allocation7], 4
          %s299 = int_to_ptr.vmem [resolvable:$true] %s298
          %301 = dma.hbm_to_vmem [thread:$0]  %s7, 16, %s299, [#allocation6]
        $region40: #{_forward_jit.1} parent=11 // pred_fallthru
          _
        // Predicated region
        $region41: #{_forward_jit.1} parent=11 // pred_check
          %p302 = pneg %p212
        $region42: #{_forward_jit.1} parent=11 // pred_check_branch
          %304 = sbr.rel (%p302) target = $region44
        $region43: #{_forward_jit.1} parent=11 // pred_region
          _
        $region44: #{_forward_jit.1} parent=11 // pred_fallthru
          _
      $region12: #{_forward_jit.1} parent=5 // pred_fallthru
        _
      %p305 = scmp.lt.s32.totalorder %s18, 2
      // Predicated region
      $region45: #{_forward_jit.1} parent=5 // pred_check
        %p306 = pneg %p305
      $region46: #{_forward_jit.1} parent=5 // pred_check_branch
        %308 = sbr.rel (%p306) target = $region48
      $region47: #{_forward_jit.1} parent=5 // pred_region
        // Predicated region
        $region49: #{_forward_jit.1} parent=47 // pred_check
          %p309 = pneg %p38
        $region50: #{_forward_jit.1} parent=47 // pred_check_branch
          %311 = sbr.rel (%p309) target = $region52
        $region51: #{_forward_jit.1} parent=47 // pred_region
          %p312 = scmp.lt.s32.totalorder %s18, 1
          %s313 = scalar_select %p312, %s18, 1
          %s314 = smul.addr %s313, 4
          %s315 = scalar_lea.vmem %s0, %s314
        $region52: #{_forward_jit.1} parent=47 // pred_fallthru
          _
      $region48: #{_forward_jit.1} parent=5 // pred_fallthru
        _
      %p316 = scmp.le.s32.totalorder 1, %s18
      %p317 = scmp.lt.s32.totalorder %s18, 3
      %p318 = pnand %p316, %p317
      %p319 = pneg %p318
      // Predicated region
      $region53: #{_forward_jit.1} parent=5 // pred_check
        _
      $region54: #{_forward_jit.1} parent=5 // pred_check_branch
        %321 = sbr.rel (%p318) target = $region56
      $region55: #{_forward_jit.1} parent=5 // pred_region
        %s322 = ssub.s32 %s18, 1
        // Predicated region
        $region57: #{_forward_jit.1} parent=55 // pred_check
          %p323 = pneg %p107
        $region58: #{_forward_jit.1} parent=55 // pred_check_branch
          %325 = sbr.rel (%p323) target = $region60
        $region59: #{_forward_jit.1} parent=55 // pred_region
          %326 = dma.done [#allocation4], 1024
        $region60: #{_forward_jit.1} parent=55 // pred_fallthru
          _
        // Predicated region
        $region61: #{_forward_jit.1} parent=55 // pred_check
          %p327 = pneg %p149
        $region62: #{_forward_jit.1} parent=55 // pred_check_branch
          %329 = sbr.rel (%p327) target = $region64
        $region63: #{_forward_jit.1} parent=55 // pred_region
          %330 = dma.done [#allocation6], 1024
        $region64: #{_forward_jit.1} parent=55 // pred_fallthru
          _
        // Predicated region
        $region65: #{_forward_jit.1} parent=55 // pred_check
          %p331 = pneg %p191
        $region66: #{_forward_jit.1} parent=55 // pred_check_branch
          %333 = sbr.rel (%p331) target = $region68
        $region67: #{_forward_jit.1} parent=55 // pred_region
          %334 = dma.done [#allocation6], 16
        $region68: #{_forward_jit.1} parent=55 // pred_fallthru
          _
        %p335 = scmp.lt.s32.totalorder %s23, 1
        %s336 = scalar_select %p335, %s23, 1
        %s337 = smul.addr %s336, 4
        %s338 = scalar_lea.vmem %s0, %s337
        %p339 = pneg %p44
        %p340 = pneg %p41
        %p341 = pneg %p65
        %p342 = pneg %p62
        %p343 = pneg %p86
        %p344 = pneg %p83
        %p345 = pneg %p107
        %p346 = pneg %p104
        %p347 = pneg %p128
        %p348 = pneg %p125
        %p349 = pneg %p149
        %p350 = pneg %p146
        %p351 = pneg %p170
        %p352 = pneg %p167
        %p353 = pneg %p191
        %p354 = pneg %p188
        %p355 = pneg %p212
        %p356 = pneg %p209
        %p357 = pneg %p238
        %p358 = pneg %p235
        %p359 = scmp.lt.s32.totalorder %s23, 1
        %s360 = scalar_select %p359, %s23, 1
        %s361 = scalar_lea.vmem %s9, %s360
        %p362 = scmp.lt.s32.totalorder %s23, 1
        %s363 = scalar_select %p362, %s23, 1
        %s364 = smul.addr %s363, 4
        %s365 = scalar_lea.vmem %s0, %s364
        %p366 = scmp.lt.s32.totalorder %s23, 1
        %s367 = scalar_select %p366, %s23, 1
        %s368 = scalar_lea.vmem %s9, %s367
        %v371 = vld [vmem:[%s365] sm:$0xf]
        %v372 = vld [vmem:[%s1] sm:$0xf]
        %v373 = vld [vmem:[%s1 + $0x4] sm:$0xf]
        %v374 = vld [vmem:[%s1 + $0x8] sm:$0xf]
        %v375 = vld [vmem:[%s1 + $0xc] sm:$0xf]
        %v376 = vld [vmem:[%s1 + $0x10] sm:$0xf]
        %v377 = vld [vmem:[%s1 + $0x14] sm:$0xf]
        %v378 = vld [vmem:[%s1 + $0x18] sm:$0xf]
        %v379 = vld [vmem:[%s1 + $0x1c] sm:$0xf]
        %v380 = vld [vmem:[%s1 + $0x20] sm:$0xf]
        %v381 = vld [vmem:[%s1 + $0x24] sm:$0xf]
        %v382 = vld [vmem:[%s1 + $0x28] sm:$0xf]
        %v383 = vld [vmem:[%s1 + $0x2c] sm:$0xf]
        %v384 = vld [vmem:[%s1 + $0x30] sm:$0xf]
        %v385 = vld [vmem:[%s1 + $0x34] sm:$0xf]
        %v386 = vld [vmem:[%s1 + $0x38] sm:$0xf]
        %v387 = vld [vmem:[%s1 + $0x3c] sm:$0xf]
        %v388 = vld [vmem:[%s2] sm:$0x1]
        %v390 = vlaneseq
        %v391 = vshrl.u32 %v390, 7
        %v392 = vsub.s32 0, %v391
        %v393 = vrot.slane %v388, %v392
        %v411 = vunpack.c.l.b16 %v372
        %v412 = vunpack.c.l.b16 %v373
        %v413 = vunpack.c.l.b16 %v374
        %v414 = vunpack.c.l.b16 %v375
        %v415 = vunpack.c.l.b16 %v376
        %v416 = vunpack.c.l.b16 %v377
        %v417 = vunpack.c.l.b16 %v378
        %v418 = vunpack.c.l.b16 %v379
        %v419 = vunpack.c.l.b16 %v380
        %v420 = vunpack.c.l.b16 %v381
        %v421 = vunpack.c.l.b16 %v382
        %v422 = vunpack.c.l.b16 %v383
        %v423 = vunpack.c.l.b16 %v384
        %v424 = vunpack.c.l.b16 %v385
        %v425 = vunpack.c.l.b16 %v386
        %v426 = vunpack.c.l.b16 %v387
        %v427 = vpack.c.b16 %v412, %v411
        %v428 = vpack.c.b16 %v414, %v413
        %v429 = vpack.c.b16 %v416, %v415
        %v430 = vpack.c.b16 %v418, %v417
        %v431 = vpack.c.b16 %v420, %v419
        %v432 = vpack.c.b16 %v422, %v421
        %v433 = vpack.c.b16 %v424, %v423
        %v434 = vpack.c.b16 %v426, %v425
        %443 = vmatprep.subr.bf16.mxu0 0
        %444 = vmatpush1.bf16.msra.mxu0 %v427
        %445 = vmatprep.subr.bf16.mxu0 0
        %446 = vmatpush1.bf16.msra.mxu0 %v428
        %447 = vmatprep.subr.bf16.mxu0 0
        %448 = vmatpush1.bf16.msra.mxu0 %v429
        %449 = vmatprep.subr.bf16.mxu0 0
        %450 = vmatpush1.bf16.msra.mxu0 %v430
        %451 = vmatprep.subr.bf16.mxu0 0
        %452 = vmatpush1.bf16.msra.mxu0 %v431
        %453 = vmatprep.subr.bf16.mxu0 0
        %454 = vmatpush1.bf16.msra.mxu0 %v432
        %455 = vmatprep.subr.bf16.mxu0 0
        %456 = vmatpush1.bf16.msra.mxu0 %v433
        %457 = vmatprep.subr.bf16.mxu0 0
        %458 = vmatpush1.bf16.msra.mxu0 %v434
        %459 = vmatprep.subr.bf16.mxu0 0
        %460 = vmatpush1.bf16.msra.mxu0 0
        %461 = vmatprep.subr.bf16.mxu0 0
        %462 = vmatpush1.bf16.msra.mxu0 0
        %463 = vmatprep.subr.bf16.mxu0 0
        %464 = vmatpush1.bf16.msra.mxu0 0
        %465 = vmatprep.subr.bf16.mxu0 0
        %466 = vmatpush1.bf16.msra.mxu0 0
        %467 = vmatprep.subr.bf16.mxu0 0
        %468 = vmatpush1.bf16.msra.mxu0 0
        %469 = vmatprep.subr.bf16.mxu0 0
        %470 = vmatpush1.bf16.msra.mxu0 0
        %471 = vmatprep.subr.bf16.mxu0 0
        %472 = vmatpush1.bf16.msra.mxu0 0
        %473 = vmatprep.subr.bf16.mxu0 0
        %474 = vmatpush1.bf16.msra.mxu0 0
        %475 = vmatprep.mubr.bf16.mxu0 0
        %476 = vmatmul.mubr.bf16.gmra.mrb[0].mxu0 %v371
        %v477 = vpop.f32.mrb[0].mxu0
        %v478 = vadd.f32 %v393, %v477
        %v479 = vpop.f32.mrb[0].mxu0
        %v480 = vpop.f32.mrb[0].mxu0
        %v481 = vpop.f32.mrb[0].mxu0
        %482 = vdwg.mxu0
        %v483 = vpack.c.bf16 %v478, %v478
        %v484 = vmul.bf16 %v483, 1009007652
        %v485 = vmax.bf16 %v483, %v484
        %v486 = vld [vmem:[#allocation3] sm:$0xf]
        %v487 = vld [vmem:[#allocation3 + $0x4] sm:$0xf]
        %v488 = vld [vmem:[#allocation3 + $0x8] sm:$0xf]
        %v489 = vld [vmem:[#allocation3 + $0xc] sm:$0xf]
        %v490 = vld [vmem:[#allocation3 + $0x10] sm:$0xf]
        %v491 = vld [vmem:[#allocation3 + $0x14] sm:$0xf]
        %v492 = vld [vmem:[#allocation3 + $0x18] sm:$0xf]
        %v493 = vld [vmem:[#allocation3 + $0x1c] sm:$0xf]
        %v494 = vld [vmem:[#allocation3 + $0x20] sm:$0xf]
        %v495 = vld [vmem:[#allocation3 + $0x24] sm:$0xf]
        %v496 = vld [vmem:[#allocation3 + $0x28] sm:$0xf]
        %v497 = vld [vmem:[#allocation3 + $0x2c] sm:$0xf]
        %v498 = vld [vmem:[#allocation3 + $0x30] sm:$0xf]
        %v499 = vld [vmem:[#allocation3 + $0x34] sm:$0xf]
        %v500 = vld [vmem:[#allocation3 + $0x38] sm:$0xf]
        %v501 = vld [vmem:[#allocation3 + $0x3c] sm:$0xf]
        %v502 = vld [vmem:[%s4] sm:$0x1]
        %v504 = vlaneseq
        %v505 = vshrl.u32 %v504, 7
        %v506 = vsub.s32 0, %v505
        %v507 = vrot.slane %v502, %v506
        %v525 = vunpack.c.l.b16 %v486
        %v526 = vunpack.c.l.b16 %v487
        %v527 = vunpack.c.l.b16 %v488
        %v528 = vunpack.c.l.b16 %v489
        %v529 = vunpack.c.l.b16 %v490
        %v530 = vunpack.c.l.b16 %v491
        %v531 = vunpack.c.l.b16 %v492
        %v532 = vunpack.c.l.b16 %v493
        %v533 = vunpack.c.l.b16 %v494
        %v534 = vunpack.c.l.b16 %v495
        %v535 = vunpack.c.l.b16 %v496
        %v536 = vunpack.c.l.b16 %v497
        %v537 = vunpack.c.l.b16 %v498
        %v538 = vunpack.c.l.b16 %v499
        %v539 = vunpack.c.l.b16 %v500
        %v540 = vunpack.c.l.b16 %v501
        %v541 = vpack.c.b16 %v526, %v525
        %v542 = vpack.c.b16 %v528, %v527
        %v543 = vpack.c.b16 %v530, %v529
        %v544 = vpack.c.b16 %v532, %v531
        %v545 = vpack.c.b16 %v534, %v533
        %v546 = vpack.c.b16 %v536, %v535
        %v547 = vpack.c.b16 %v538, %v537
        %v548 = vpack.c.b16 %v540, %v539
        %557 = vmatprep.subr.bf16.mxu0 0
        %558 = vmatpush1.bf16.msra.mxu0 %v541
        %559 = vmatprep.subr.bf16.mxu0 0
        %560 = vmatpush1.bf16.msra.mxu0 %v542
        %561 = vmatprep.subr.bf16.mxu0 0
        %562 = vmatpush1.bf16.msra.mxu0 %v543
        %563 = vmatprep.subr.bf16.mxu0 0
        %564 = vmatpush1.bf16.msra.mxu0 %v544
        %565 = vmatprep.subr.bf16.mxu0 0
        %566 = vmatpush1.bf16.msra.mxu0 %v545
        %567 = vmatprep.subr.bf16.mxu0 0
        %568 = vmatpush1.bf16.msra.mxu0 %v546
        %569 = vmatprep.subr.bf16.mxu0 0
        %570 = vmatpush1.bf16.msra.mxu0 %v547
        %571 = vmatprep.subr.bf16.mxu0 0
        %572 = vmatpush1.bf16.msra.mxu0 %v548
        %573 = vmatprep.subr.bf16.mxu0 0
        %574 = vmatpush1.bf16.msra.mxu0 0
        %575 = vmatprep.subr.bf16.mxu0 0
        %576 = vmatpush1.bf16.msra.mxu0 0
        %577 = vmatprep.subr.bf16.mxu0 0
        %578 = vmatpush1.bf16.msra.mxu0 0
        %579 = vmatprep.subr.bf16.mxu0 0
        %580 = vmatpush1.bf16.msra.mxu0 0
        %581 = vmatprep.subr.bf16.mxu0 0
        %582 = vmatpush1.bf16.msra.mxu0 0
        %583 = vmatprep.subr.bf16.mxu0 0
        %584 = vmatpush1.bf16.msra.mxu0 0
        %585 = vmatprep.subr.bf16.mxu0 0
        %586 = vmatpush1.bf16.msra.mxu0 0
        %587 = vmatprep.subr.bf16.mxu0 0
        %588 = vmatpush1.bf16.msra.mxu0 0
        %589 = vmatprep.mubr.bf16.mxu0 0
        %590 = vmatmul.mubr.bf16.gmra.mrb[0].mxu0 %v485
        %v591 = vpop.f32.mrb[0].mxu0
        %v592 = vadd.f32 %v507, %v591
        %v593 = vpop.f32.mrb[0].mxu0
        %v594 = vpop.f32.mrb[0].mxu0
        %v595 = vpop.f32.mrb[0].mxu0
        %596 = vdwg.mxu0
        %v597 = vpack.c.bf16 %v592, %v592
        %v598 = vmul.bf16 %v597, 1009007652
        %v599 = vmax.bf16 %v597, %v598
        %v600 = vld [vmem:[#allocation5] sm:$0xf]
        %v601 = vld [vmem:[#allocation5 + $0x4] sm:$0xf]
        %v602 = vld [vmem:[#allocation5 + $0x8] sm:$0xf]
        %v603 = vld [vmem:[#allocation5 + $0xc] sm:$0xf]
        %v604 = vld [vmem:[#allocation5 + $0x10] sm:$0xf]
        %v605 = vld [vmem:[#allocation5 + $0x14] sm:$0xf]
        %v606 = vld [vmem:[#allocation5 + $0x18] sm:$0xf]
        %v607 = vld [vmem:[#allocation5 + $0x1c] sm:$0xf]
        %v608 = vld [vmem:[#allocation5 + $0x20] sm:$0xf]
        %v609 = vld [vmem:[#allocation5 + $0x24] sm:$0xf]
        %v610 = vld [vmem:[#allocation5 + $0x28] sm:$0xf]
        %v611 = vld [vmem:[#allocation5 + $0x2c] sm:$0xf]
        %v612 = vld [vmem:[#allocation5 + $0x30] sm:$0xf]
        %v613 = vld [vmem:[#allocation5 + $0x34] sm:$0xf]
        %v614 = vld [vmem:[#allocation5 + $0x38] sm:$0xf]
        %v615 = vld [vmem:[#allocation5 + $0x3c] sm:$0xf]
        %v616 = vld [vmem:[%s6] sm:$0x1]
        %v618 = vlaneseq
        %v619 = vshrl.u32 %v618, 7
        %v620 = vsub.s32 0, %v619
        %v621 = vrot.slane %v616, %v620
        %v639 = vunpack.c.l.b16 %v600
        %v640 = vunpack.c.l.b16 %v601
        %v641 = vunpack.c.l.b16 %v602
        %v642 = vunpack.c.l.b16 %v603
        %v643 = vunpack.c.l.b16 %v604
        %v644 = vunpack.c.l.b16 %v605
        %v645 = vunpack.c.l.b16 %v606
        %v646 = vunpack.c.l.b16 %v607
        %v647 = vunpack.c.l.b16 %v608
        %v648 = vunpack.c.l.b16 %v609
        %v649 = vunpack.c.l.b16 %v610
        %v650 = vunpack.c.l.b16 %v611
        %v651 = vunpack.c.l.b16 %v612
        %v652 = vunpack.c.l.b16 %v613
        %v653 = vunpack.c.l.b16 %v614
        %v654 = vunpack.c.l.b16 %v615
        %v655 = vpack.c.b16 %v640, %v639
        %v656 = vpack.c.b16 %v642, %v641
        %v657 = vpack.c.b16 %v644, %v643
        %v658 = vpack.c.b16 %v646, %v645
        %v659 = vpack.c.b16 %v648, %v647
        %v660 = vpack.c.b16 %v650, %v649
        %v661 = vpack.c.b16 %v652, %v651
        %v662 = vpack.c.b16 %v654, %v653
        %671 = vmatprep.subr.bf16.mxu0 0
        %672 = vmatpush1.bf16.msra.mxu0 %v655
        %673 = vmatprep.subr.bf16.mxu0 0
        %674 = vmatpush1.bf16.msra.mxu0 %v656
        %675 = vmatprep.subr.bf16.mxu0 0
        %676 = vmatpush1.bf16.msra.mxu0 %v657
        %677 = vmatprep.subr.bf16.mxu0 0
        %678 = vmatpush1.bf16.msra.mxu0 %v658
        %679 = vmatprep.subr.bf16.mxu0 0
        %680 = vmatpush1.bf16.msra.mxu0 %v659
        %681 = vmatprep.subr.bf16.mxu0 0
        %682 = vmatpush1.bf16.msra.mxu0 %v660
        %683 = vmatprep.subr.bf16.mxu0 0
        %684 = vmatpush1.bf16.msra.mxu0 %v661
        %685 = vmatprep.subr.bf16.mxu0 0
        %686 = vmatpush1.bf16.msra.mxu0 %v662
        %687 = vmatprep.subr.bf16.mxu0 0
        %688 = vmatpush1.bf16.msra.mxu0 0
        %689 = vmatprep.subr.bf16.mxu0 0
        %690 = vmatpush1.bf16.msra.mxu0 0
        %691 = vmatprep.subr.bf16.mxu0 0
        %692 = vmatpush1.bf16.msra.mxu0 0
        %693 = vmatprep.subr.bf16.mxu0 0
        %694 = vmatpush1.bf16.msra.mxu0 0
        %695 = vmatprep.subr.bf16.mxu0 0
        %696 = vmatpush1.bf16.msra.mxu0 0
        %697 = vmatprep.subr.bf16.mxu0 0
        %698 = vmatpush1.bf16.msra.mxu0 0
        %699 = vmatprep.subr.bf16.mxu0 0
        %700 = vmatpush1.bf16.msra.mxu0 0
        %701 = vmatprep.subr.bf16.mxu0 0
        %702 = vmatpush1.bf16.msra.mxu0 0
        %703 = vmatprep.mubr.bf16.mxu0 0
        %704 = vmatmul.mubr.bf16.gmra.mrb[0].mxu0 %v599
        %v705 = vpop.f32.mrb[0].mxu0
        %v706 = vadd.f32 %v621, %v705
        %v707 = vpop.f32.mrb[0].mxu0
        %v708 = vpop.f32.mrb[0].mxu0
        %v709 = vpop.f32.mrb[0].mxu0
        %710 = vdwg.mxu0
        %v711 = vmul.f32 %v706, 0.01
        %v712 = vmax.f32 %v706, %v711
        %v713 = vld [vmem:[#allocation7] sm:$0x1]
        %s714 = sld [smem:[#allocation2]]
        %v715 = vstv %s714
        %716 = vmatprep.subr.mxu0 0.0
        %717 = vmatpush1.xpose.msra.mxu0 %v712
        %718 = vmatprep.subr.mxu0 0.0
        %719 = vmatpush1.xpose.msra.mxu0 0.0
        %720 = vmatprep.subr.mxu0 0.0
        %721 = vmatpush1.xpose.msra.mxu0 0.0
        %722 = vmatprep.subr.mxu0 0.0
        %723 = vmatpush1.xpose.msra.mxu0 0.0
        %724 = vmatprep.subr.mxu0 0.0
        %725 = vmatpush1.xpose.msra.mxu0 0.0
        %726 = vmatprep.subr.mxu0 0.0
        %727 = vmatpush1.xpose.msra.mxu0 0.0
        %728 = vmatprep.subr.mxu0 0.0
        %729 = vmatpush1.xpose.msra.mxu0 0.0
        %730 = vmatprep.subr.mxu0 0.0
        %731 = vmatpush1.xpose.msra.mxu0 0.0
        %732 = vmatprep.subr.mxu0 0.0
        %733 = vmatpush1.xpose.msra.mxu0 0.0
        %734 = vmatprep.subr.mxu0 0.0
        %735 = vmatpush1.xpose.msra.mxu0 0.0
        %736 = vmatprep.subr.mxu0 0.0
        %737 = vmatpush1.xpose.msra.mxu0 0.0
        %738 = vmatprep.subr.mxu0 0.0
        %739 = vmatpush1.xpose.msra.mxu0 0.0
        %740 = vmatprep.subr.mxu0 0.0
        %741 = vmatpush1.xpose.msra.mxu0 0.0
        %742 = vmatprep.subr.mxu0 0.0
        %743 = vmatpush1.xpose.msra.mxu0 0.0
        %744 = vmatprep.subr.mxu0 0.0
        %745 = vmatpush1.xpose.msra.mxu0 0.0
        %746 = vmatprep.subr.mxu0 0.0
        %747 = vmatpush1.xpose.msra.mxu0 0.0
        %748 = vmatprep.subr.mxu0 0.0
        %749 = vmatpush1.xpose.msra.mxu0 0.0
        %750 = vmatprep.subr.mxu0 0.0
        %751 = vmatpush1.xpose.msra.mxu0 0.0
        %752 = vmatprep.subr.mxu0 0.0
        %753 = vmatpush1.xpose.msra.mxu0 0.0
        %754 = vmatprep.subr.mxu0 0.0
        %755 = vmatpush1.xpose.msra.mxu0 0.0
        %756 = vmatprep.subr.mxu0 0.0
        %757 = vmatpush1.xpose.msra.mxu0 0.0
        %758 = vmatprep.subr.mxu0 0.0
        %759 = vmatpush1.xpose.msra.mxu0 0.0
        %760 = vmatprep.subr.mxu0 0.0
        %761 = vmatpush1.xpose.msra.mxu0 0.0
        %762 = vmatprep.subr.mxu0 0.0
        %763 = vmatpush1.xpose.msra.mxu0 0.0
        %764 = vmatprep.subr.mxu0 0.0
        %765 = vmatpush1.xpose.msra.mxu0 0.0
        %766 = vmatprep.subr.mxu0 0.0
        %767 = vmatpush1.xpose.msra.mxu0 0.0
        %768 = vmatprep.subr.mxu0 0.0
        %769 = vmatpush1.xpose.msra.mxu0 0.0
        %770 = vmatprep.subr.mxu0 0.0
        %771 = vmatpush1.xpose.msra.mxu0 0.0
        %772 = vmatprep.subr.mxu0 0.0
        %773 = vmatpush1.xpose.msra.mxu0 0.0
        %774 = vmatprep.subr.mxu0 0.0
        %775 = vmatpush1.xpose.msra.mxu0 0.0
        %776 = vmatprep.subr.mxu0 0.0
        %777 = vmatpush1.xpose.msra.mxu0 0.0
        %778 = vmatprep.subr.mxu0 0.0
        %779 = vmatpush1.xpose.msra.mxu0 0.0
        %780 = vmatprep.mubr.f32.mxu0 0.0
        %781 = vmatmul.mubr.f32.gmra.mrb[0].mxu0 %v713
        %v782 = vpop.f32.mrb[0].mxu0
        %v783 = vadd.f32 %v715, %v782
        %v784 = vpop.f32.mrb[0].mxu0
        %785 = vdwg.mxu0
        %vm786 = vcmask 57344
        %787 = vst.msk [vmem:[%s368] sm:$0x1] %vm786, %v783
        %p788 = scmp.lt.s32.totalorder %s23, 1
        %s789 = scalar_select %p788, %s23, 1
        %s790 = scalar_lea.vmem %s9, %s789
        // Predicated region
        $region69: #{_forward_jit.1} parent=55 // pred_check
          %p791 = pneg %p235
        $region70: #{_forward_jit.1} parent=55 // pred_check_branch
          %793 = sbr.rel (%p791) target = $region72
        $region71: #{_forward_jit.1} parent=55 // pred_region
          _
        $region72: #{_forward_jit.1} parent=55 // pred_fallthru
          _
      $region56: #{_forward_jit.1} parent=5 // pred_fallthru
        _
      %p794 = scmp.le.s32.totalorder 2, %s18
      // Predicated region
      $region73: #{_forward_jit.1} parent=5 // pred_check
        %p795 = pneg %p794
      $region74: #{_forward_jit.1} parent=5 // pred_check_branch
        %797 = sbr.rel (%p795) target = $region76
      $region75: #{_forward_jit.1} parent=5 // pred_region
        %s798 = ssub.s32 %s18, 2
        // Predicated region
        $region77: #{_forward_jit.1} parent=75 // pred_check
          %p799 = pneg %p241
        $region78: #{_forward_jit.1} parent=75 // pred_check_branch
          %801 = sbr.rel (%p799) target = $region80
        $region79: #{_forward_jit.1} parent=75 // pred_region
          %p802 = scmp.lt.s32.totalorder %s24, 1
          %s803 = scalar_select %p802, %s24, 1
          %s804 = scalar_lea.vmem %s9, %s803
        $region80: #{_forward_jit.1} parent=75 // pred_fallthru
          _
      $region76: #{_forward_jit.1} parent=5 // pred_fallthru
        _
    $region6: #{_forward_jit.1} parent=1 // loop_footer
      %s22 = sadd.s32 1, %s18
    $region7: #{_forward_jit.1} parent=1 // loop_footer_branch
      %17 = sbr.rel target = $region3
    $region8: #{_forward_jit.1} parent=1 // loop_exit
      _
    %805 = vsyncpa [#allocation4], 1
    %s806 = scalar_lea.sflag [#allocation4], 1
    %807 = vsyncpa %s806, 1
    %808 = vsyncpa [#allocation6], 1

</llo_original>
